<compile_context>
chip_gen: v7x
topology: tpu7x:2x2x1
jax: 0.10.0
libtpu: 0.0.40
codegen_flags: <defaults>
</compile_context>

<pallas_src>
import functools

import jax
import jax.numpy as jnp
from jax import lax
from jax.experimental import pallas as pl
from jax.experimental.pallas import tpu as pltpu

_LANES = 128
_SUBLANES = 8
_GROUP = _SUBLANES * _LANES      # 1024 elements per (8, 128) vreg group
_MAX_BLOCK_GROUPS = 512          # (512, 8, 128) f32 tile = 2 MiB per input


def _mse_block_kernel(pred_ref, real_ref, sum_ref, cnt_ref, *,
                      valid_groups, block_groups):
    """One grid step: per-lane partial sum of masked squared diffs + count."""
    pred = pred_ref[...].astype(jnp.float32)
    real = real_ref[...].astype(jnp.float32)

    nz = real != 0.0
    if valid_groups % block_groups != 0:
        # Last block overruns the array: mask out-of-bounds (garbage) groups.
        i = pl.program_id(0)
        grp = lax.broadcasted_iota(jnp.int32, pred.shape, 0) + i * block_groups
        mask = jnp.logical_and(grp < valid_groups, nz)
    else:
        mask = nz

    # pred_loss[real == 0] = 0  ->  diff is 0 wherever real == 0 (or padded).
    diff = jnp.where(mask, real - pred, 0.0)

    # Reduce over the leading (group) axis only: pure vreg adds, lane-dense
    # (1, 8, 128) writes; the final reduction happens once in the wrapper.
    sum_ref[...] = jnp.sum(diff * diff, axis=0, keepdims=True)
    cnt_ref[...] = jnp.sum(mask.astype(jnp.int32), axis=0, keepdims=True)


def loss_mse(pred: jax.Array, real: jax.Array) -> jax.Array:
    """Masked MSE matching LossMSE.forward. Returns a scalar float32."""
    assert pred.shape == real.shape
    pred_f = pred.reshape(-1)
    real_f = real.reshape(-1)
    total = pred_f.shape[0]

    groups = -(-total // _GROUP)
    pad = groups * _GROUP - total
    if pad:
        # Minimal tail pad only (padded zeros in `real` are masked out).
        pred_f = jnp.pad(pred_f, (0, pad))
        real_f = jnp.pad(real_f, (0, pad))

    pred3d = pred_f.reshape(groups, _SUBLANES, _LANES)
    real3d = real_f.reshape(groups, _SUBLANES, _LANES)

    bg = min(_MAX_BLOCK_GROUPS, groups)     # block rows (groups) per step
    nblocks = -(-groups // bg)

    kernel = functools.partial(_mse_block_kernel,
                               valid_groups=groups, block_groups=bg)

    part_sum, part_cnt = pl.pallas_call(
        kernel,
        out_shape=(
            jax.ShapeDtypeStruct((nblocks, _SUBLANES, _LANES), jnp.float32),
            jax.ShapeDtypeStruct((nblocks, _SUBLANES, _LANES), jnp.int32),
        ),
        grid_spec=pltpu.PrefetchScalarGridSpec(
            num_scalar_prefetch=0,
            grid=(nblocks,),
            in_specs=[
                pl.BlockSpec((bg, _SUBLANES, _LANES), lambda i: (i, 0, 0)),
                pl.BlockSpec((bg, _SUBLANES, _LANES), lambda i: (i, 0, 0)),
            ],
            out_specs=(
                pl.BlockSpec((1, _SUBLANES, _LANES), lambda i: (i, 0, 0)),
                pl.BlockSpec((1, _SUBLANES, _LANES), lambda i: (i, 0, 0)),
            ),
        ),
        compiler_params=pltpu.CompilerParams(
            dimension_semantics=("parallel",),
        ),
    )(pred3d, real3d)

    total_sum = jnp.sum(part_sum)                 # f32 tree reduction
    total_cnt = jnp.sum(part_cnt)                 # exact int32 count
    return total_sum / total_cnt.astype(jnp.float32)


def _reference(pred, real):
    mask = real != 0.0
    diff = jnp.where(mask, real - pred, 0.0)
    n = jnp.sum(mask.astype(jnp.float32))
    return jnp.sum(diff * diff) / n


if __name__ == "__main__":
    key = jax.random.PRNGKey(0)
    k1, k2, k3 = jax.random.split(key, 3)

    # Small, module-consistent shapes: NCHW predictions / targets.
    shape = (2, 4, 16, 16)
    pred = jax.random.normal(k1, shape, dtype=jnp.float32)
    real = jax.random.normal(k2, shape, dtype=jnp.float32)
    # Make ~half of `real` exactly zero so the masking / nonzero count matters.
    zero_mask = jax.random.bernoulli(k3, p=0.5, shape=shape)
    real = jnp.where(zero_mask, 0.0, real)

    out = jax.block_until_ready(loss_mse(pred, real))
    ref = jax.block_until_ready(_reference(pred, real))
    assert jnp.allclose(out, ref, rtol=1e-5, atol=1e-6), (out, ref)

    # Non-multiple-of-(8*128) element count: exercises the tail-pad path.
    shape2 = (2, 4, 16, 15)
    k4, k5, k6 = jax.random.split(k3, 3)
    pred2 = jax.random.normal(k4, shape2, dtype=jnp.float32)
    real2 = jax.random.normal(k5, shape2, dtype=jnp.float32)
    real2 = jnp.where(jax.random.bernoulli(k6, p=0.5, shape=shape2), 0.0, real2)
    out2 = jax.block_until_ready(loss_mse(pred2, real2))
    ref2 = jax.block_until_ready(_reference(pred2, real2))
    assert jnp.allclose(out2, ref2, rtol=1e-5, atol=1e-6), (out2, ref2)

    print("KERNEL_OK")
</pallas_src>

<mosaic_0001>
module attributes {stable_mosaic.version = 11 : i64} {
  func.func @_mse_block_kernel(%arg0: i32, %arg1: memref<2x8x128xf32, #tpu.memory_space<vmem>>, %arg2: memref<2x8x128xf32, #tpu.memory_space<vmem>>, %arg3: memref<1x8x128xf32, #tpu.memory_space<vmem>>, %arg4: memref<1x8x128xi32, #tpu.memory_space<vmem>>) attributes {dimension_semantics = [#tpu.dimension_semantics<parallel>], iteration_bounds = array<i64: 1>, scalar_prefetch = 0 : i64, scratch_operands = 0 : i64, tpu.core_type = #tpu.core_type<tc>, window_params = [{transform_indices = @transform_0, window_bounds = array<i64: 2, 8, 128>}, {transform_indices = @transform_1, window_bounds = array<i64: 2, 8, 128>}, {transform_indices = @transform_2, window_bounds = array<i64: 1, 8, 128>}, {transform_indices = @transform_3, window_bounds = array<i64: 1, 8, 128>}]} {
    %c0 = arith.constant 0 : index
    %c0_0 = arith.constant 0 : index
    %c0_1 = arith.constant 0 : index
    %0 = vector.load %arg1[%c0, %c0_0, %c0_1] : memref<2x8x128xf32, #tpu.memory_space<vmem>>, vector<2x8x128xf32>
    %c0_2 = arith.constant 0 : index
    %c0_3 = arith.constant 0 : index
    %c0_4 = arith.constant 0 : index
    %1 = vector.load %arg2[%c0_2, %c0_3, %c0_4] : memref<2x8x128xf32, #tpu.memory_space<vmem>>, vector<2x8x128xf32>
    %cst = arith.constant 0.000000e+00 : f32
    %2 = vector.broadcast %cst : f32 to vector<2x8x128xf32>
    %3 = arith.cmpf one, %1, %2 : vector<2x8x128xf32>
    %4 = arith.subf %1, %0 : vector<2x8x128xf32>
    %cst_5 = arith.constant 0.000000e+00 : f32
    %5 = vector.broadcast %cst_5 : f32 to vector<2x8x128xf32>
    %6 = arith.select %3, %4, %5 : vector<2x8x128xi1>, vector<2x8x128xf32>
    %7 = arith.mulf %6, %6 : vector<2x8x128xf32>
    %cst_6 = arith.constant dense<0.000000e+00> : vector<8x128xf32>
    %8 = vector.multi_reduction <add>, %7, %cst_6 [0] : vector<2x8x128xf32> to vector<8x128xf32>
    %9 = vector.shape_cast %8 : vector<8x128xf32> to vector<1x8x128xf32>
    %c0_7 = arith.constant 0 : index
    %c0_8 = arith.constant 0 : index
    %c0_9 = arith.constant 0 : index
    %10 = vector.load %arg3[%c0_7, %c0_8, %c0_9] : memref<1x8x128xf32, #tpu.memory_space<vmem>>, vector<1x8x128xf32>
    tpu.vector_store %arg3[%c0_7, %c0_8, %c0_9], %9 {strides = array<i32>} : memref<1x8x128xf32, #tpu.memory_space<vmem>>, vector<1x8x128xf32>,
    %11 = arith.extui %3 : vector<2x8x128xi1> to vector<2x8x128xi32>
    %cst_10 = arith.constant dense<0> : vector<8x128xi32>
    %12 = vector.multi_reduction <add>, %11, %cst_10 [0] : vector<2x8x128xi32> to vector<8x128xi32>
    %13 = vector.shape_cast %12 : vector<8x128xi32> to vector<1x8x128xi32>
    %c0_11 = arith.constant 0 : index
    %c0_12 = arith.constant 0 : index
    %c0_13 = arith.constant 0 : index
    %14 = vector.load %arg4[%c0_11, %c0_12, %c0_13] : memref<1x8x128xi32, #tpu.memory_space<vmem>>, vector<1x8x128xi32>
    tpu.vector_store %arg4[%c0_11, %c0_12, %c0_13], %13 {strides = array<i32>} : memref<1x8x128xi32, #tpu.memory_space<vmem>>, vector<1x8x128xi32>,
    return
  }
  func.func @transform_0(%arg0: i32) -> (i32, i32, i32) {
    %c0_i32 = arith.constant 0 : i32
    %c0_i32_0 = arith.constant 0 : i32
    %c0_i32_1 = arith.constant 0 : i32
    return %arg0, %c0_i32, %c0_i32_0 : i32, i32, i32
  }
  func.func @transform_1(%arg0: i32) -> (i32, i32, i32) {
    %c0_i32 = arith.constant 0 : i32
    %c0_i32_0 = arith.constant 0 : i32
    %c0_i32_1 = arith.constant 0 : i32
    return %arg0, %c0_i32, %c0_i32_0 : i32, i32, i32
  }
  func.func @transform_2(%arg0: i32) -> (i32, i32, i32) {
    %c0_i32 = arith.constant 0 : i32
    %c0_i32_0 = arith.constant 0 : i32
    %c0_i32_1 = arith.constant 0 : i32
    return %arg0, %c0_i32, %c0_i32_0 : i32, i32, i32
  }
  func.func @transform_3(%arg0: i32) -> (i32, i32, i32) {
    %c0_i32 = arith.constant 0 : i32
    %c0_i32_0 = arith.constant 0 : i32
    %c0_i32_1 = arith.constant 0 : i32
    return %arg0, %c0_i32, %c0_i32_0 : i32, i32, i32
  }
}

</mosaic_0001>

<llo_original>
// kernel: tpu_custom_call.1
$region0: #{tpu_custom_call.1}
  #allocation0 [shape = 'u32[]', space=smem, size = 0x4, offset = 0x4, fixed_abs, tag = 'smem constant byte address 0x4 - core index']
  #allocation1 [shape = 'u32[144,128]{1,0:T(1,128)}', space=vmem, size = 0x12000, scoped, tag = 'internal scratch']
  %s0 = inlined_call_operand.hbm [shape: f32[2,8,128], index: 0, kind: input, shape index: {}]
  %s1 = inlined_call_operand.hbm [shape: f32[2,8,128], index: 1, kind: input, shape index: {}]
  %s2 = inlined_call_operand.hbm [shape: f32[1,8,128], index: 2, kind: output, shape index: {0}]
  %s3 = inlined_call_operand.hbm [shape: s32[1,8,128], index: 3, kind: output, shape index: {1}]
  %4 = xla_tuple %s2, %s3
  %s5 = sld [smem:[#allocation0]]
  $region34: #{tpu_custom_call.1} parent=0
    _
  %s7 = ssub.s32 1, %s5
  %s8 = scalar_select 0, %s7, %s5
  $region1: #{tpu_custom_call.1} parent=0
    #allocation2 [shape = 'u8[8192]{0}', space=vmem, size = 0x2000, scoped, tag = 'input window, operand 0, single buffered']
    #allocation3 [shape = 's32[1]{0}', space=sflag, size = 0x4, scoped, tag = 'scoped memory for tpu_custom_call.1']
    #allocation4 [shape = 's32[1]{0}', space=sflag, size = 0x4, scoped, tag = 'scoped memory for tpu_custom_call.1']
    #allocation5 [shape = 'u8[8192]{0}', space=vmem, size = 0x2000, scoped, tag = 'input window, operand 1, single buffered']
    #allocation6 [shape = 's32[1]{0}', space=sflag, size = 0x4, scoped, tag = 'scoped memory for tpu_custom_call.1']
    #allocation7 [shape = 'u8[4096]{0}', space=vmem, size = 0x1000, scoped, tag = 'output window, operand 0, single buffered']
    #allocation8 [shape = 'u8[4096]{0}', space=vmem, size = 0x1000, scoped, tag = 'output window, operand 1, single buffered']
    #allocation9 [shape = 's32[1]{0}', space=sflag, size = 0x4, scoped, tag = 'scoped memory for tpu_custom_call.1']
    %9 = vsyncpa [#allocation3], 0
    %10 = vsyncpa [#allocation6], 0
    %11 = vsyncpa [#allocation4], 0
    %12 = vsyncpa [#allocation9], 0
    // Predicated region
    $region2: #{tpu_custom_call.1} parent=1 // pred_check
      _
    $region3: #{tpu_custom_call.1} parent=1 // pred_check_branch
      %14 = sbr.rel (0) target = $region5
    $region4: #{tpu_custom_call.1} parent=1 // pred_region
      %s16 = ssub.s32 256, 256
      %17 = vsyncadd [#allocation3], %s16
      %s18 = sshll.u32 [#allocation2], 4
      %s19 = int_to_ptr.vmem [resolvable:$true] %s18
      %24 = dma.hbm_to_vmem [thread:$0]  %s0, 256, %s19, [#allocation3], 128, 128, 8
    $region5: #{tpu_custom_call.1} parent=1 // pred_fallthru
      _
    // Predicated region
    $region6: #{tpu_custom_call.1} parent=1 // pred_check
      _
    $region7: #{tpu_custom_call.1} parent=1 // pred_check_branch
      %26 = sbr.rel (0) target = $region9
    $region8: #{tpu_custom_call.1} parent=1 // pred_region
      %s28 = ssub.s32 256, 256
      %29 = vsyncadd [#allocation6], %s28
      %s30 = sshll.u32 [#allocation5], 4
      %s31 = int_to_ptr.vmem [resolvable:$true] %s30
      %36 = dma.hbm_to_vmem [thread:$0]  %s1, 256, %s31, [#allocation6], 128, 128, 8
    $region9: #{tpu_custom_call.1} parent=1 // pred_fallthru
      _
    // Predicated region
    $region10: #{tpu_custom_call.1} parent=1 // pred_check
      _
    $region11: #{tpu_custom_call.1} parent=1 // pred_check_branch
      %38 = sbr.rel (0) target = $region13
    $region12: #{tpu_custom_call.1} parent=1 // pred_region
      %39 = dma.done [#allocation3], 256
    $region13: #{tpu_custom_call.1} parent=1 // pred_fallthru
      _
    // Predicated region
    $region14: #{tpu_custom_call.1} parent=1 // pred_check
      _
    $region15: #{tpu_custom_call.1} parent=1 // pred_check_branch
      %41 = sbr.rel (0) target = $region17
    $region16: #{tpu_custom_call.1} parent=1 // pred_region
      %42 = dma.done [#allocation6], 256
    $region17: #{tpu_custom_call.1} parent=1 // pred_fallthru
      _
    %v43 = vld [vmem:[#allocation2] sm:$0xff]
    %v44 = vld [vmem:[#allocation2 + $0x8] sm:$0xff]
    %v45 = vld [vmem:[#allocation5] sm:$0xff]
    %v46 = vld [vmem:[#allocation5 + $0x8] sm:$0xff]
    %vm47 = vcmp.ne.f32.partialorder %v45, 0.0
    %vm48 = vcmp.ne.f32.partialorder %v46, 0.0
    %v49 = vsub.f32 %v45, %v43
    %v50 = vsub.f32 %v46, %v44
    %v51 = vsel %vm47, %v49, 0.0
    %v52 = vsel %vm48, %v50, 0.0
    %v53 = vmul.f32 %v51, %v51
    %v54 = vmul.f32 %v52, %v52
    %v55 = vadd.f32 %v53, %v54
    %56 = vst [vmem:[#allocation7] sm:$0xff] %v55
    %v57 = vsel %vm47, 1, 0
    %v58 = vsel %vm48, 1, 0
    %v59 = vadd.s32 %v57, %v58
    %60 = vst [vmem:[#allocation8] sm:$0xff] %v59
    // Predicated region
    $region18: #{tpu_custom_call.1} parent=1 // pred_check
      _
    $region19: #{tpu_custom_call.1} parent=1 // pred_check_branch
      %62 = sbr.rel (0) target = $region21
    $region20: #{tpu_custom_call.1} parent=1 // pred_region
      %s64 = ssub.s32 128, 128
      %65 = vsyncadd [#allocation4], %s64
      %s67 = sshll.u32 [#allocation7], 4
      %s68 = int_to_ptr.vmem [resolvable:$true] %s67
      %70 = dma.vmem_to_hbm [thread:$0]  %s68, 128, %s2, [#allocation4]
    $region21: #{tpu_custom_call.1} parent=1 // pred_fallthru
      _
    // Predicated region
    $region22: #{tpu_custom_call.1} parent=1 // pred_check
      _
    $region23: #{tpu_custom_call.1} parent=1 // pred_check_branch
      %72 = sbr.rel (0) target = $region25
    $region24: #{tpu_custom_call.1} parent=1 // pred_region
      %s74 = ssub.s32 128, 128
      %75 = vsyncadd [#allocation9], %s74
      %s77 = sshll.u32 [#allocation8], 4
      %s78 = int_to_ptr.vmem [resolvable:$true] %s77
      %80 = dma.vmem_to_hbm [thread:$0]  %s78, 128, %s3, [#allocation9]
    $region25: #{tpu_custom_call.1} parent=1 // pred_fallthru
      _
    // Predicated region
    $region26: #{tpu_custom_call.1} parent=1 // pred_check
      _
    $region27: #{tpu_custom_call.1} parent=1 // pred_check_branch
      %82 = sbr.rel (0) target = $region29
    $region28: #{tpu_custom_call.1} parent=1 // pred_region
      %83 = dma.done [#allocation4], 128
    $region29: #{tpu_custom_call.1} parent=1 // pred_fallthru
      _
    // Predicated region
    $region30: #{tpu_custom_call.1} parent=1 // pred_check
      _
    $region31: #{tpu_custom_call.1} parent=1 // pred_check_branch
      %85 = sbr.rel (0) target = $region33
    $region32: #{tpu_custom_call.1} parent=1 // pred_region
      %86 = dma.done [#allocation9], 128
    $region33: #{tpu_custom_call.1} parent=1 // pred_fallthru
      _
    %87 = vsyncpa [#allocation3], 1
    %88 = vsyncpa [#allocation6], 1
    %89 = vsyncpa [#allocation4], 1
    %90 = vsyncpa [#allocation9], 1

</llo_original>
